<compile_context>
chip_gen: v5e
topology: v5e:2x2
jax: 0.10.0
libtpu: 0.0.40
codegen_flags: <defaults>
</compile_context>

<pallas_src>
import functools

import jax
import jax.numpy as jnp
from jax import lax
from jax.experimental import pallas as pl
from jax.experimental.pallas import tpu as pltpu


def _instance_loss_kernel(zr_ref, zc_ref, out_ref, m_sc, l_sc, *, n_valid):
    """One (row-block, column-block) step of the streaming logsumexp.

    zr_ref : (TM, D) row tile of z * (1/T)   (MXU operand dtype)
    zc_ref : (TK, D) column tile of z        (MXU operand dtype)
    out_ref: (1, 1, TM) per-row logsumexp_{j != i} sim[i, j] / T   (lane-dense)
    m_sc, l_sc: (1, TM) running row max / row sum scratch (f32)
    """
    r = pl.program_id(0)            # row-block index       ("parallel")
    c = pl.program_id(1)            # column-block index    (innermost, "arbitrary")
    nc = pl.num_programs(1)
    tm = zr_ref.shape[0]
    tk = zc_ref.shape[0]

    @pl.when(c == 0)
    def _init():
        m_sc[...] = jnp.full(m_sc.shape, -jnp.inf, jnp.float32)
        l_sc[...] = jnp.zeros(l_sc.shape, jnp.float32)

    # "Transposed" sim tile so the softmax row index sits on the lane axis:
    #   s[a, b] = z[c*TK + a] . (z[r*TM + b] / T) == sim[r*TM + b, c*TK + a] / T
    s = lax.dot_general(zc_ref[...], zr_ref[...], (((1,), (1,)), ((), ())),
                        preferred_element_type=jnp.float32)           # (TK, TM) f32

    row0 = r * tm
    col0 = c * tk
    # Only ~1-2 column tiles per row block intersect the diagonal, and only the
    # last column tiles can contain padded columns: gate the mask work on a scalar.
    needs_mask = jnp.logical_or(
        jnp.logical_and(row0 < col0 + tk, col0 < row0 + tm),   # diag intersects tile
        col0 + tk > n_valid)                                   # tile has padded cols

    def _apply_mask(x):
        col_ids = col0 + lax.broadcasted_iota(jnp.int32, (tk, tm), 0)
        row_ids = row0 + lax.broadcasted_iota(jnp.int32, (tk, tm), 1)
        bad = jnp.logical_or(col_ids == row_ids, col_ids >= n_valid)
        return jnp.where(bad, -jnp.inf, x)

    masked = lax.cond(needs_mask, _apply_mask, lambda x: x, s)

    # Online (streaming) logsumexp update over column tiles; per-row state is
    # lane-dense (1, TM), reductions are over the sublane axis of the tile.
    m_prev = m_sc[...]                                          # (1, TM)
    m_new = jnp.maximum(m_prev, jnp.max(masked, axis=0, keepdims=True))
    alpha = jnp.exp(m_prev - m_new)                             # first tile: exp(-inf) = 0
    p = jnp.exp(masked - m_new)                                 # masked entries -> 0
    l_sc[...] = alpha * l_sc[...] + jnp.sum(p, axis=0, keepdims=True)
    m_sc[...] = m_new

    @pl.when(c == nc - 1)
    def _finalize():
        lse = m_sc[...] + jnp.log(l_sc[...])                    # (1, TM)
        out_ref[...] = lse.reshape(out_ref.shape)               # (1, 1, TM) lane-dense store


def _pick_tile(n, cap):
    """Largest divisor of `n` that is <= cap, preferring multiples of 128 (lane/MXU
    alignment), falling back to multiples of 8.  Assumes n % 8 == 0."""
    cap = min(n, cap)
    for step in (128, 8):
        cand = (cap // step) * step
        while cand >= step:
            if n % cand == 0:
                return cand
            cand -= step
    return n


def _est_vmem_bytes(tm, tk, d, in_itemsize):
    # double-buffered row + column input tiles, ~6 (TK, TM) f32 intermediates,
    # plus scratch / output rows (rough, with headroom).
    return (2 * 2 * in_itemsize * (tm + tk) * d) + (6 * 4 * tm * tk) + (4 * 16 * tm)


def instance_loss(z_i, z_j, temperature, *, mxu_dtype=jnp.bfloat16,
                  tm_cap=1024, tk_cap=512):
    """Equivalent of InstanceLoss(batch_size, temperature).forward(z_i, z_j).

    mxu_dtype: dtype of the MXU operands.  bfloat16 (default) runs at full MXU rate
      and halves HBM/VMEM traffic of the input streams; float32 reproduces PyTorch
      f32 numerics.  All softmax / logsumexp math is f32 either way.
    """
    B, D = z_i.shape
    assert z_j.shape == (B, D)
    N = 2 * B
    inv_t = 1.0 / float(temperature)

    z = jnp.concatenate([z_i, z_j], axis=0).astype(jnp.float32)        # (N, D)

    # Positive logits are an O(N*D) row-wise dot: compute them wrapper-side in f32
    # and fold into the final reduction.  Removes the third (partner) DMA stream
    # from the kernel entirely -> VMEM headroom (matters most on v7x's 64 MiB).
    zp = jnp.concatenate([z_j, z_i], axis=0).astype(jnp.float32)       # zp[i] = z[(i+B) % N]
    pos_sum = jnp.sum(z * zp) * inv_t                                  # sum_i sim[i, partner(i)]/T

    # Pad rows/columns up to a multiple of 8 (replaces the old TM=N fallback:
    # keeps the row axis splittable across TensorCores for any batch size).
    Np = ((N + 7) // 8) * 8
    pad = Np - N
    z_pad = jnp.pad(z, ((0, pad), (0, 0))) if pad else z

    # Fold 1/T into the row-operand stream once (wrapper-side); cast both MXU
    # operand streams to mxu_dtype.
    zr = (z_pad * inv_t).astype(mxu_dtype)                             # (Np, D) row stream
    zc = z_pad.astype(mxu_dtype)                                       # (Np, D) column stream
    in_itemsize = jnp.dtype(mxu_dtype).itemsize

    # Per-generation VMEM budget: ~70% of physical per-core VMEM (~45 MiB on v7x's
    # 64 MiB, ~90 MiB on v5e/v6e's 128 MiB), made explicit via vmem_limit_bytes so a
    # misestimate fails loudly at compile time instead of silently shrinking tiles.
    try:
        vmem_cap = int(pltpu.get_tpu_info().vmem_capacity_bytes)
    except Exception:
        vmem_cap = 64 * 1024 * 1024        # conservative fallback (v7x-sized)
    vmem_budget = min(int(vmem_cap * 0.70), 96 * 1024 * 1024)
    vmem_limit = min(vmem_cap, vmem_budget + (16 << 20))

    # TM is the arithmetic-intensity lever (the column stream is re-read Np/TM times)
    # and the lane dim of the sim tile: keep it as large as the budget allows.
    # Shrink TK first, TM only as a last resort.
    TM = _pick_tile(Np, tm_cap)
    TK = _pick_tile(Np, tk_cap)
    while TK > 8 and _est_vmem_bytes(TM, TK, D, in_itemsize) > vmem_budget:
        TK = _pick_tile(Np, TK - 8)
    while TM > 8 and _est_vmem_bytes(TM, TK, D, in_itemsize) > vmem_budget:
        TM = _pick_tile(Np, TM - 8)

    nR = Np // TM
    nC = Np // TK

    kernel = functools.partial(_instance_loss_kernel, n_valid=N)

    grid_spec = pltpu.PrefetchScalarGridSpec(
        num_scalar_prefetch=0,
        grid=(nR, nC),
        in_specs=[
            pl.BlockSpec((TM, D), lambda r, c: (r, 0)),    # row tile (already scaled by 1/T)
            pl.BlockSpec((TK, D), lambda r, c: (c, 0)),    # column tile
        ],
        out_specs=pl.BlockSpec((1, 1, TM), lambda r, c: (r, 0, 0)),
        scratch_shapes=[
            pltpu.VMEM((1, TM), jnp.float32),              # running row max
            pltpu.VMEM((1, TM), jnp.float32),              # running row sum
        ],
    )

    cost = pl.CostEstimate(
        flops=2 * Np * Np * D,
        transcendentals=Np * Np,
        bytes_accessed=(nR * Np * D * in_itemsize          # column stream, re-read per row block
                        + Np * D * in_itemsize             # row stream
                        + Np * 4),                         # per-row output
    )

    lse = pl.pallas_call(
        kernel,
        out_shape=jax.ShapeDtypeStruct((nR, 1, TM), jnp.float32),
        grid_spec=grid_spec,
        compiler_params=pltpu.CompilerParams(
            dimension_semantics=("parallel", "arbitrary"),
            vmem_limit_bytes=vmem_limit,
        ),
        cost_estimate=cost,
    )(zr, zc)

    per_row_lse = lse.reshape(-1)[:N]                      # drop padded rows
    return (jnp.sum(per_row_lse) - pos_sum) / jnp.float32(N)


def _instance_loss_ref(z_i, z_j, temperature):
    """Pure-JAX reference mirroring the PyTorch module."""
    B = z_i.shape[0]
    N = 2 * B
    z = jnp.concatenate([z_i, z_j], axis=0).astype(jnp.float32)
    sim = (z @ z.T) / temperature
    idx = jnp.arange(N)
    pos = sim[idx, (idx + B) % N]
    masked = jnp.where(jnp.eye(N, dtype=bool), -jnp.inf, sim)
    lse = jax.scipy.special.logsumexp(masked, axis=1)
    return jnp.sum(lse - pos) / N


if __name__ == "__main__":
    batch_size = 8
    hidden = 32
    temperature = 0.5

    key = jax.random.PRNGKey(0)
    k1, k2 = jax.random.split(key)
    z_i = jax.random.normal(k1, (batch_size, hidden), dtype=jnp.float32)
    z_j = jax.random.normal(k2, (batch_size, hidden), dtype=jnp.float32)

    ref = _instance_loss_ref(z_i, z_j, temperature)

    # Exact-semantics path (f32 MXU operands): must match the reference tightly.
    loss_f32 = instance_loss(z_i, z_j, temperature, mxu_dtype=jnp.float32)
    jax.block_until_ready(loss_f32)
    assert jnp.allclose(loss_f32, ref, rtol=1e-4, atol=1e-4), (loss_f32, ref)

    # Default fast path (bf16 MXU operands, f32 accumulation / softmax): bf16-level tolerance.
    loss_bf16 = instance_loss(z_i, z_j, temperature)
    jax.block_until_ready(loss_bf16)
    assert jnp.allclose(loss_bf16, ref, rtol=2e-2, atol=5e-2), (loss_bf16, ref)

    # Batch size not a multiple of 8 exercises the row/column padding + masking path.
    k3, k4 = jax.random.split(k2)
    z_i5 = jax.random.normal(k3, (5, hidden), dtype=jnp.float32)
    z_j5 = jax.random.normal(k4, (5, hidden), dtype=jnp.float32)
    ref5 = _instance_loss_ref(z_i5, z_j5, temperature)
    loss5 = instance_loss(z_i5, z_j5, temperature, mxu_dtype=jnp.float32)
    jax.block_until_ready(loss5)
    assert jnp.allclose(loss5, ref5, rtol=1e-4, atol=1e-4), (loss5, ref5)

    print("KERNEL_OK")
</pallas_src>

<mosaic_0001>
module attributes {stable_mosaic.version = 11 : i64} {
  func.func @_instance_loss_kernel(%arg0: i32, %arg1: i32, %arg2: memref<16x32xf32, #tpu.memory_space<vmem>>, %arg3: memref<16x32xf32, #tpu.memory_space<vmem>>, %arg4: memref<1x1x16xf32, #tpu.memory_space<vmem>>, %arg5: memref<1x16xf32, #tpu.memory_space<vmem>>, %arg6: memref<1x16xf32, #tpu.memory_space<vmem>>) attributes {dimension_semantics = [#tpu.dimension_semantics<parallel>, #tpu.dimension_semantics<arbitrary>], iteration_bounds = array<i64: 1, 1>, scalar_prefetch = 0 : i64, scratch_operands = 2 : i64, tpu.core_type = #tpu.core_type<tc>, window_params = [{transform_indices = @transform_0, window_bounds = array<i64: 16, 32>}, {transform_indices = @transform_1, window_bounds = array<i64: 16, 32>}, {transform_indices = @transform_2, window_bounds = array<i64: 1, 1, 16>}]} {
    %c0_i32 = arith.constant 0 : i32
    %0 = arith.cmpi eq, %arg1, %c0_i32 : i32
    %1 = arith.extui %0 : i1 to i32
    %c0_i32_0 = arith.constant 0 : i32
    %2 = arith.cmpi ne, %1, %c0_i32_0 : i32
    scf.if %2 {
      %cst_22 = arith.constant 0xFF800000 : f32
      %38 = vector.broadcast %cst_22 : f32 to vector<1x16xf32>
      %c0_23 = arith.constant 0 : index
      %c0_24 = arith.constant 0 : index
      %39 = vector.load %arg5[%c0_23, %c0_24] : memref<1x16xf32, #tpu.memory_space<vmem>>, vector<1x16xf32>
      tpu.vector_store %arg5[%c0_23, %c0_24], %38 {strides = array<i32>} : memref<1x16xf32, #tpu.memory_space<vmem>>, vector<1x16xf32>,
      %cst_25 = arith.constant 0.000000e+00 : f32
      %40 = vector.broadcast %cst_25 : f32 to vector<1x16xf32>
      %c0_26 = arith.constant 0 : index
      %c0_27 = arith.constant 0 : index
      %41 = vector.load %arg6[%c0_26, %c0_27] : memref<1x16xf32, #tpu.memory_space<vmem>>, vector<1x16xf32>
      tpu.vector_store %arg6[%c0_26, %c0_27], %40 {strides = array<i32>} : memref<1x16xf32, #tpu.memory_space<vmem>>, vector<1x16xf32>,
    } else {
    }
    %c0 = arith.constant 0 : index
    %c0_1 = arith.constant 0 : index
    %3 = vector.load %arg3[%c0, %c0_1] : memref<16x32xf32, #tpu.memory_space<vmem>>, vector<16x32xf32>
    %c0_2 = arith.constant 0 : index
    %c0_3 = arith.constant 0 : index
    %4 = vector.load %arg2[%c0_2, %c0_3] : memref<16x32xf32, #tpu.memory_space<vmem>>, vector<16x32xf32>
    %cst = arith.constant dense<0.000000e+00> : vector<16x16xf32>
    %5 = tpu.matmul %3, %4, %cst {dimension_numbers = #tpu.dot_dimension_numbers<[1], [1], [0], [0], [0, 0, 1, 0], [], []>} : vector<16x32xf32>, vector<16x32xf32>, vector<16x16xf32> -> vector<16x16xf32>
    %c16_i32 = arith.constant 16 : i32
    %6 = arith.muli %arg0, %c16_i32 : i32
    %c16_i32_4 = arith.constant 16 : i32
    %7 = arith.muli %arg1, %c16_i32_4 : i32
    %c16_i32_5 = arith.constant 16 : i32
    %8 = arith.addi %7, %c16_i32_5 : i32
    %9 = arith.cmpi slt, %6, %8 : i32
    %c16_i32_6 = arith.constant 16 : i32
    %10 = arith.addi %6, %c16_i32_6 : i32
    %11 = arith.cmpi slt, %7, %10 : i32
    %12 = arith.andi %9, %11 : i1
    %c16_i32_7 = arith.constant 16 : i32
    %13 = arith.addi %7, %c16_i32_7 : i32
    %c16_i32_8 = arith.constant 16 : i32
    %14 = arith.cmpi sgt, %13, %c16_i32_8 : i32
    %15 = arith.ori %12, %14 : i1
    %16 = arith.extui %15 : i1 to i32
    %c0_i32_9 = arith.constant 0 : i32
    %17 = arith.cmpi ne, %16, %c0_i32_9 : i32
    %18 = scf.if %17 -> (vector<16x16xf32>) {
      %38 = tpu.iota {dimensions = array<i32: 0>} : vector<16x16xi32>
      %39 = vector.broadcast %7 : i32 to vector<16x16xi32>
      %40 = arith.addi %39, %38 : vector<16x16xi32>
      %41 = tpu.iota {dimensions = array<i32: 1>} : vector<16x16xi32>
      %42 = vector.broadcast %6 : i32 to vector<16x16xi32>
      %43 = arith.addi %42, %41 : vector<16x16xi32>
      %44 = arith.cmpi eq, %40, %43 : vector<16x16xi32>
      %c16_i32_22 = arith.constant 16 : i32
      %45 = vector.broadcast %c16_i32_22 : i32 to vector<16x16xi32>
      %46 = arith.cmpi sge, %40, %45 : vector<16x16xi32>
      %47 = arith.ori %44, %46 : vector<16x16xi1>
      %cst_23 = arith.constant 0xFF800000 : f32
      %48 = vector.broadcast %cst_23 : f32 to vector<16x16xf32>
      %49 = arith.select %47, %48, %5 : vector<16x16xi1>, vector<16x16xf32>
      scf.yield %49 : vector<16x16xf32>
    } else {
      scf.yield %5 : vector<16x16xf32>
    }
    %c0_10 = arith.constant 0 : index
    %c0_11 = arith.constant 0 : index
    %19 = vector.load %arg5[%c0_10, %c0_11] : memref<1x16xf32, #tpu.memory_space<vmem>>, vector<1x16xf32>
    %cst_12 = arith.constant dense<0xFF800000> : vector<16xf32>
    %20 = vector.multi_reduction <maximumf>, %18, %cst_12 [0] : vector<16x16xf32> to vector<16xf32>
    %21 = vector.shape_cast %20 : vector<16xf32> to vector<1x16xf32>
    %22 = arith.maximumf %19, %21 : vector<1x16xf32>
    %23 = arith.subf %19, %22 : vector<1x16xf32>
    %24 = math.exp %23 : vector<1x16xf32>
    %25 = vector.broadcast %22 : vector<1x16xf32> to vector<16x16xf32>
    %26 = arith.subf %18, %25 : vector<16x16xf32>
    %27 = math.exp %26 : vector<16x16xf32>
    %c0_13 = arith.constant 0 : index
    %c0_14 = arith.constant 0 : index
    %28 = vector.load %arg6[%c0_13, %c0_14] : memref<1x16xf32, #tpu.memory_space<vmem>>, vector<1x16xf32>
    %29 = arith.mulf %24, %28 : vector<1x16xf32>
    %cst_15 = arith.constant dense<0.000000e+00> : vector<16xf32>
    %30 = vector.multi_reduction <add>, %27, %cst_15 [0] : vector<16x16xf32> to vector<16xf32>
    %31 = vector.shape_cast %30 : vector<16xf32> to vector<1x16xf32>
    %32 = arith.addf %29, %31 : vector<1x16xf32>
    %c0_16 = arith.constant 0 : index
    %c0_17 = arith.constant 0 : index
    %33 = vector.load %arg6[%c0_16, %c0_17] : memref<1x16xf32, #tpu.memory_space<vmem>>, vector<1x16xf32>
    tpu.vector_store %arg6[%c0_16, %c0_17], %32 {strides = array<i32>} : memref<1x16xf32, #tpu.memory_space<vmem>>, vector<1x16xf32>,
    %c0_18 = arith.constant 0 : index
    %c0_19 = arith.constant 0 : index
    %34 = vector.load %arg5[%c0_18, %c0_19] : memref<1x16xf32, #tpu.memory_space<vmem>>, vector<1x16xf32>
    tpu.vector_store %arg5[%c0_18, %c0_19], %22 {strides = array<i32>} : memref<1x16xf32, #tpu.memory_space<vmem>>, vector<1x16xf32>,
    %c0_i32_20 = arith.constant 0 : i32
    %35 = arith.cmpi eq, %arg1, %c0_i32_20 : i32
    %36 = arith.extui %35 : i1 to i32
    %c0_i32_21 = arith.constant 0 : i32
    %37 = arith.cmpi ne, %36, %c0_i32_21 : i32
    scf.if %37 {
      %c0_22 = arith.constant 0 : index
      %c0_23 = arith.constant 0 : index
      %38 = vector.load %arg5[%c0_22, %c0_23] : memref<1x16xf32, #tpu.memory_space<vmem>>, vector<1x16xf32>
      %c0_24 = arith.constant 0 : index
      %c0_25 = arith.constant 0 : index
      %39 = vector.load %arg6[%c0_24, %c0_25] : memref<1x16xf32, #tpu.memory_space<vmem>>, vector<1x16xf32>
      %40 = math.log %39 : vector<1x16xf32>
      %41 = arith.addf %38, %40 : vector<1x16xf32>
      %42 = vector.shape_cast %41 : vector<1x16xf32> to vector<1x1x16xf32>
      %c0_26 = arith.constant 0 : index
      %c0_27 = arith.constant 0 : index
      %c0_28 = arith.constant 0 : index
      %43 = vector.load %arg4[%c0_26, %c0_27, %c0_28] : memref<1x1x16xf32, #tpu.memory_space<vmem>>, vector<1x1x16xf32>
      tpu.vector_store %arg4[%c0_26, %c0_27, %c0_28], %42 {strides = array<i32>} : memref<1x1x16xf32, #tpu.memory_space<vmem>>, vector<1x1x16xf32>,
    } else {
    }
    return
  }
  func.func @transform_0(%arg0: i32, %arg1: i32) -> (i32, i32) {
    %c0_i32 = arith.constant 0 : i32
    %c0_i32_0 = arith.constant 0 : i32
    return %arg0, %c0_i32 : i32, i32
  }
  func.func @transform_1(%arg0: i32, %arg1: i32) -> (i32, i32) {
    %c0_i32 = arith.constant 0 : i32
    %c0_i32_0 = arith.constant 0 : i32
    return %arg1, %c0_i32 : i32, i32
  }
  func.func @transform_2(%arg0: i32, %arg1: i32) -> (i32, i32, i32) {
    %c0_i32 = arith.constant 0 : i32
    %c0_i32_0 = arith.constant 0 : i32
    %c0_i32_1 = arith.constant 0 : i32
    return %arg0, %c0_i32, %c0_i32_0 : i32, i32, i32
  }
}

</mosaic_0001>

<llo_original>
// kernel: tpu_custom_call.1
$region0: #{tpu_custom_call.1}
  #allocation0 [shape = 'u32[]', space=smem, size = 0x4, offset = 0x4, fixed_abs, tag = 'smem constant byte address 0x4 - core index']
  #allocation1 [shape = 'u32[72,128]{1,0:T(1,128)}', space=vmem, size = 0x9000, scoped, tag = 'internal scratch']
  #allocation2 [shape = 'f32[1,16]{1,0:T(1,128)}', space=vmem, size = 0x200, scoped, tag = 'scratch operand']
  #allocation3 [shape = 'f32[1,16]{1,0:T(1,128)}', space=vmem, size = 0x200, scoped, tag = 'scratch operand']
  %s0 = inlined_call_operand.hbm [shape: f32[16,32], index: 0, kind: input, shape index: {}]
  %s1 = inlined_call_operand.hbm [shape: f32[16,32], index: 1, kind: input, shape index: {}]
  %s2 = inlined_call_operand.hbm [shape: f32[1,1,16], index: 2, kind: output, shape index: {}]
  %s3 = sld [smem:[#allocation0]]
  $region42: #{tpu_custom_call.1} parent=0
    _
  %s5 = ssub.s32 1, %s3
  %s6 = scalar_select 0, %s5, %s3
  $region1: #{tpu_custom_call.1} parent=0
    #allocation4 [shape = 'u8[8192]{0}', space=vmem, size = 0x2000, scoped, tag = 'input window, operand 0, single buffered']
    #allocation5 [shape = 's32[1]{0}', space=sflag, size = 0x4, scoped, tag = 'scoped memory for tpu_custom_call.1']
    #allocation6 [shape = 's32[1]{0}', space=sflag, size = 0x4, scoped, tag = 'scoped memory for tpu_custom_call.1']
    #allocation7 [shape = 'u8[8192]{0}', space=vmem, size = 0x2000, scoped, tag = 'input window, operand 1, single buffered']
    #allocation8 [shape = 's32[1]{0}', space=sflag, size = 0x4, scoped, tag = 'scoped memory for tpu_custom_call.1']
    #allocation9 [shape = 'u8[512]{0}', space=vmem, size = 0x400, scoped, tag = 'output window, operand 0, single buffered']
    %7 = vsyncpa [#allocation5], 0
    %8 = vsyncpa [#allocation8], 0
    %9 = vsyncpa [#allocation6], 0
    // Predicated region
    $region2: #{tpu_custom_call.1} parent=1 // pred_check
      _
    $region3: #{tpu_custom_call.1} parent=1 // pred_check_branch
      %11 = sbr.rel (0) target = $region5
    $region4: #{tpu_custom_call.1} parent=1 // pred_region
      %13 = vsyncadd [#allocation5], 0
      %s14 = sshll.u32 %s0, 4
      %s15 = int_to_ptr.hbm [resolvable:$true] %s14
      %s16 = sshll.u32 [#allocation4], 4
      %s17 = int_to_ptr.vmem [resolvable:$true] %s16
      %22 = dma.hbm_to_vmem [thread:$0]  %s15, 256, %s17, [#allocation5], 128, 128, 8
    $region5: #{tpu_custom_call.1} parent=1 // pred_fallthru
      _
    // Predicated region
    $region6: #{tpu_custom_call.1} parent=1 // pred_check
      _
    $region7: #{tpu_custom_call.1} parent=1 // pred_check_branch
      %24 = sbr.rel (0) target = $region9
    $region8: #{tpu_custom_call.1} parent=1 // pred_region
      %26 = vsyncadd [#allocation8], 0
      %s27 = sshll.u32 %s1, 4
      %s28 = int_to_ptr.hbm [resolvable:$true] %s27
      %s29 = sshll.u32 [#allocation7], 4
      %s30 = int_to_ptr.vmem [resolvable:$true] %s29
      %35 = dma.hbm_to_vmem [thread:$0]  %s28, 256, %s30, [#allocation8], 128, 128, 8
    $region9: #{tpu_custom_call.1} parent=1 // pred_fallthru
      _
    // Predicated region
    $region10: #{tpu_custom_call.1} parent=1 // pred_check
      _
    $region11: #{tpu_custom_call.1} parent=1 // pred_check_branch
      %37 = sbr.rel (0) target = $region13
    $region12: #{tpu_custom_call.1} parent=1 // pred_region
      %39 = dma.done [#allocation5], 256
    $region13: #{tpu_custom_call.1} parent=1 // pred_fallthru
      _
    // Predicated region
    $region14: #{tpu_custom_call.1} parent=1 // pred_check
      _
    $region15: #{tpu_custom_call.1} parent=1 // pred_check_branch
      %41 = sbr.rel (0) target = $region17
    $region16: #{tpu_custom_call.1} parent=1 // pred_region
      %43 = dma.done [#allocation8], 256
    $region17: #{tpu_custom_call.1} parent=1 // pred_fallthru
      _
    %p44 = scmp.eq.s32.totalorder 0, 0
    // Predicated region
    $region18: #{tpu_custom_call.1} parent=1 // pred_check
      %p45 = pneg %p44
    $region19: #{tpu_custom_call.1} parent=1 // pred_check_branch
      %47 = sbr.rel (%p45) target = $region21
    $region20: #{tpu_custom_call.1} parent=1 // pred_region
      %vm48 = vcmask 122880
      %49 = vst.msk [vmem:[#allocation2] sm:$0x1] %vm48, -inf
      %50 = vst.msk [vmem:[#allocation3] sm:$0x1] %vm48, 0.0
    $region21: #{tpu_custom_call.1} parent=1 // pred_fallthru
      _
    %v51 = vld [vmem:[#allocation7] sm:$0xff]
    %v52 = vld [vmem:[#allocation7 + $0x8] sm:$0xff]
    %v53 = vld [vmem:[#allocation4] sm:$0xff]
    %v54 = vld [vmem:[#allocation4 + $0x8] sm:$0xff]
    %vm55 = vcmask 261120
    %v57 = vsel %vm55, %v51, 0
    %v60 = vsel %vm55, %v52, 0
    %v63 = vsel %vm55, %v53, 0
    %v66 = vsel %vm55, %v54, 0
    %68 = vmatpush.xpose.msra.mxu0 0.0
    %69 = vmatpush.xpose.msra.mxu0 0.0
    %70 = vmatpush.xpose.msra.mxu0 0.0
    %71 = vmatpush.xpose.msra.mxu0 0.0
    %72 = vmatpush.xpose.msra.mxu0 0.0
    %73 = vmatpush.xpose.msra.mxu0 0.0
    %74 = vmatpush.xpose.msra.mxu0 0.0
    %75 = vmatpush.xpose.msra.mxu0 0.0
    %76 = vmatpush.xpose.msra.mxu0 0.0
    %77 = vmatpush.xpose.msra.mxu0 0.0
    %78 = vmatpush.xpose.msra.mxu0 0.0
    %79 = vmatpush.xpose.msra.mxu0 0.0
    %80 = vmatpush.xpose.msra.mxu0 0.0
    %81 = vmatpush.xpose.msra.mxu0 0.0
    %82 = vmatpush.xpose.msra.mxu0 %v66
    %83 = vmatpush.xpose.msra.mxu0 %v63
    %84 = vmatmul.f32.gmra.mxu0 %v57
    %v85 = vpop.f32.mrf.mxu0
    %v86 = vadd.f32 0.0, %v85
    %87 = vmatmul.f32.gmra.mxu0 %v60
    %v88 = vpop.f32.mrf.mxu0
    %v89 = vadd.f32 0.0, %v88
    %90 = vdwg.mxu0
    %s91 = smul.u32 0, 16
    %s92 = smul.u32 0, 16
    %s93 = sadd.s32 %s92, 16
    %p94 = scmp.lt.s32.totalorder %s91, %s93
    %s95 = sadd.s32 %s91, 16
    %p96 = scmp.lt.s32.totalorder %s92, %s95
    %p97 = pnand %p94, %p96
    %p98 = pneg %p97
    %p99 = scmp.gt.s32.totalorder %s93, 16
    %p100 = por %p98, %p99
    // Predicated region
    $region22: #{tpu_custom_call.1} parent=1 // pred_check
      %p101 = pneg %p100
    $region23: #{tpu_custom_call.1} parent=1 // pred_check_branch
      %103 = sbr.rel (%p101) target = $region25
    $region24: #{tpu_custom_call.1} parent=1 // pred_region
      %v104 = vlaneseq
      %v105 = vshrl.u32 %v104, 7
      %v106 = vadd.s32 %v105, 8
      %v107 = vstv %s92
      %v108 = vadd.s32 %v107, %v105
      %v109 = vadd.s32 %v107, %v106
      %v110 = vlaneseq
      %v111 = vand.u32 %v110, 127
      %v112 = vstv %s91
      %v113 = vadd.s32 %v112, %v111
      %vm114 = vcmp.eq.s32.totalorder %v108, %v113
      %vm115 = vcmp.eq.s32.totalorder %v109, %v113
      %vm116 = vcmp.ge.s32.totalorder %v108, 16
      %vm117 = vcmp.ge.s32.totalorder %v109, 16
      %vm118 = vmor %vm114, %vm116
      %vm119 = vmor %vm115, %vm117
      %v120 = vsel %vm118, -inf, %v86
      %v121 = vsel %vm119, -inf, %v89
    $region25: #{tpu_custom_call.1} parent=1 // pred_fallthru
      %v122 = vphi 0, %v120
      %v123 = vphi 0, %v121
    %p124 = pneg %p100
    // Predicated region
    $region26: #{tpu_custom_call.1} parent=1 // pred_check
      _
    $region27: #{tpu_custom_call.1} parent=1 // pred_check_branch
      %126 = sbr.rel (%p100) target = $region29
    $region28: #{tpu_custom_call.1} parent=1 // pred_region
      _
    $region29: #{tpu_custom_call.1} parent=1 // pred_fallthru
      %v127 = vphi %v122, %v86
      %v128 = vphi %v123, %v89
    %v129 = vld [vmem:[#allocation2] sm:$0x1]
    %vm130 = vcmask 130048
    %v131 = vsel %vm130, %v127, -inf
    %v132 = vsel %vm130, %v128, -inf
    %v133 = vmax.f32 %v131, %v132
    %v134 = vrot.slane %v133, 4
    %v135 = vmax.f32 %v133, %v134
    %v136 = vrot.slane %v135, 2
    %v137 = vmax.f32 %v135, %v136
    %v138 = vrot.slane %v137, 1
    %v139 = vmax.f32 %v137, %v138
    %v140 = vmax.f32 %v129, %v139
    %v141 = vsub.f32 %v129, %v140
    %v142 = vmul.f32 %v141, 1.442695
    %v143 = vpow.pop %v142
    %v145 = vperm.slane %v140, 0
    %v147 = vsub.f32 %v127, %v145
    %v148 = vsub.f32 %v128, %v145
    %v149 = vmul.f32 %v147, 1.442695
    %v150 = vpow.pop %v149
    %v151 = vmul.f32 %v148, 1.442695
    %v152 = vpow.pop %v151
    %v153 = vld [vmem:[#allocation3] sm:$0x1]
    %v154 = vmul.f32 %v143, %v153
    %v155 = vsel %vm130, %v150, 0.0
    %v156 = vsel %vm130, %v152, 0.0
    %v157 = vadd.f32 %v155, %v156
    %v158 = vrot.slane %v157, 4
    %v159 = vadd.f32 %v157, %v158
    %v160 = vrot.slane %v159, 2
    %v161 = vadd.f32 %v159, %v160
    %v162 = vrot.slane %v161, 1
    %v163 = vadd.f32 %v161, %v162
    %v164 = vadd.f32 %v154, %v163
    %vm165 = vcmask 122880
    %166 = vst.msk [vmem:[#allocation3] sm:$0x1] %vm165, %v164
    %167 = vst.msk [vmem:[#allocation2] sm:$0x1] %vm165, %v140
    // Predicated region
    $region30: #{tpu_custom_call.1} parent=1 // pred_check
      %p168 = pneg %p44
    $region31: #{tpu_custom_call.1} parent=1 // pred_check_branch
      %170 = sbr.rel (%p168) target = $region33
    $region32: #{tpu_custom_call.1} parent=1 // pred_region
      %v171 = vld [vmem:[#allocation2] sm:$0x1]
      %v172 = vld [vmem:[#allocation3] sm:$0x1]
      %v173 = vlog2.pop %v172
      %v174 = vmul.f32 %v173, 0.6931472
      %v175 = vadd.f32 %v171, %v174
      %176 = vst.msk [vmem:[#allocation9] sm:$0x1] %vm165, %v175
    $region33: #{tpu_custom_call.1} parent=1 // pred_fallthru
      _
    // Predicated region
    $region34: #{tpu_custom_call.1} parent=1 // pred_check
      _
    $region35: #{tpu_custom_call.1} parent=1 // pred_check_branch
      %178 = sbr.rel (0) target = $region37
    $region36: #{tpu_custom_call.1} parent=1 // pred_region
      %180 = vsyncadd [#allocation6], 0
      %s182 = sshll.u32 [#allocation9], 4
      %s183 = int_to_ptr.vmem [resolvable:$true] %s182
      %s184 = sshll.u32 %s2, 4
      %s185 = int_to_ptr.hbm [resolvable:$true] %s184
      %187 = dma.vmem_to_hbm [thread:$0]  %s183, 16, %s185, [#allocation6]
    $region37: #{tpu_custom_call.1} parent=1 // pred_fallthru
      _
    // Predicated region
    $region38: #{tpu_custom_call.1} parent=1 // pred_check
      _
    $region39: #{tpu_custom_call.1} parent=1 // pred_check_branch
      %189 = sbr.rel (0) target = $region41
    $region40: #{tpu_custom_call.1} parent=1 // pred_region
      %191 = dma.done [#allocation6], 16
    $region41: #{tpu_custom_call.1} parent=1 // pred_fallthru
      _
    %192 = vsyncpa [#allocation5], 1
    %193 = vsyncpa [#allocation8], 1
    %194 = vsyncpa [#allocation6], 1

</llo_original>
